<compile_context>
chip_gen: v7x
topology: tpu7x:2x2x1
jax: 0.10.0
libtpu: 0.0.40
codegen_flags: <defaults>
</compile_context>

<pallas_src>
import functools

import jax
import jax.numpy as jnp
from jax.experimental import pallas as pl
from jax.experimental.pallas import tpu as pltpu

_LANE = 128


def _round_up(a, b):
    return (a + b - 1) // b * b


def _qdq_kernel(scale_ref, offset_ref, x_ref, o_ref, *, qmax, exact_div):
    # scale / offset are scalars living in SMEM.
    scale = scale_ref[0]
    offset = offset_ref[0]
    r_off = jnp.round(offset)                      # STE.apply(offset) forward

    # Compute in f32 in-vregs regardless of the I/O dtype (v5e has no bf16 VPU/EUP).
    x = x_ref[...].astype(jnp.float32)

    if exact_div:
        y = x / scale                              # bit-exact vs torch's divide
    else:
        y = x * (1.0 / scale)                      # scalar reciprocal, cheaper VALU path

    # Fused form of clamp(round(x/s) - r_off, 0, qmax) + r_off  (see header note).
    q = jnp.clip(jnp.round(y), r_off, qmax + r_off)
    o_ref[...] = (q * scale).astype(o_ref.dtype)


def _device_budget():
    """(bytes_per_buffer, vmem_limit_bytes_or_None, tensorcores_per_chip)."""
    try:
        kind = jax.devices()[0].device_kind.lower()
    except Exception:
        kind = ""
    if "v7" in kind:
        # 8 MiB tiles -> 4x footprint = 32 MiB; raise the 32 MiB default scoped VMEM.
        return 8 << 20, 48 << 20, 2
    if "v6" in kind:
        # 4 MiB tiles -> 16 MiB footprint, within the 32 MiB default.
        return 4 << 20, None, 1
    # v5e / unknown: stay safely inside the 16 MiB default scoped VMEM.
    return 2 << 20, None, 1


def _qdq_jnp(x, scale, offset, qmax):
    # Scalar/tail fallback (identical math to the kernel's exact_div path).
    r_off = jnp.round(offset)
    xf = x.astype(jnp.float32)
    q = jnp.clip(jnp.round(xf / scale), r_off, qmax + r_off)
    return (q * scale).astype(x.dtype)


def quant_dequant(x, scale, offset, bitwidth, *, exact_div=True, donate_input=False):
    """Elementwise quantize-dequantize (forward of AutogradQuantDequantModule).

    x: any shape, float dtype; scale/offset: scalars. Returns same shape/dtype.
    donate_input: alias x's HBM buffer for the output (only if the caller no longer
    needs the pre-quantized tensor; otherwise XLA inserts a defensive copy).
    """
    orig_shape = x.shape
    dtype = x.dtype
    n = x.size

    scale_f = jnp.asarray(scale, jnp.float32)
    offset_f = jnp.asarray(offset, jnp.float32)
    qmax = float(2 ** bitwidth - 1)

    flat = x.reshape(-1)
    n_main = (n // _LANE) * _LANE
    if n_main == 0:
        # Tiny (<128-element) tensor: trivial jnp path.
        return _qdq_jnp(flat, scale_f, offset_f, qmax).reshape(orig_shape)

    main = flat[:n_main] if n_main != n else flat
    x2d = main.reshape(-1, _LANE)
    rows = x2d.shape[0]

    # --- tile sizing: byte-budgeted per generation, even grid across TensorCores ---
    elem_bytes = jnp.dtype(dtype).itemsize
    budget_bytes, vmem_limit, cores = _device_budget()
    max_rows = max(16, budget_bytes // (_LANE * elem_bytes))
    nblocks = _round_up(pl.cdiv(rows, max_rows), cores)       # multiple of TC count
    tr = _round_up(pl.cdiv(rows, nblocks), 16)                 # (16,128)-aligned (bf16-safe)
    tr = min(tr, _round_up(rows, 16))
    grid = (pl.cdiv(rows, tr),)

    cp_kwargs = dict(dimension_semantics=("parallel",))
    if vmem_limit is not None:
        cp_kwargs["vmem_limit_bytes"] = vmem_limit

    kernel = functools.partial(_qdq_kernel, qmax=qmax, exact_div=exact_div)

    out2d = pl.pallas_call(
        kernel,
        out_shape=jax.ShapeDtypeStruct((rows, _LANE), dtype),
        grid=grid,
        in_specs=[
            pl.BlockSpec(memory_space=pltpu.SMEM),             # scale scalar
            pl.BlockSpec(memory_space=pltpu.SMEM),             # offset scalar
            pl.BlockSpec((tr, _LANE), lambda i: (i, 0)),       # x tile (VMEM)
        ],
        out_specs=pl.BlockSpec((tr, _LANE), lambda i: (i, 0)),
        compiler_params=pltpu.CompilerParams(**cp_kwargs),
        input_output_aliases=({2: 0} if donate_input else {}),
        cost_estimate=pl.CostEstimate(
            flops=6 * n_main,
            transcendentals=0,                                 # round/clip/div are VPU-class
            bytes_accessed=2 * n_main * elem_bytes),
    )(scale_f.reshape(1), offset_f.reshape(1), x2d)

    out = out2d.reshape(-1)
    if n_main != n:
        # Ragged (<128-element) tail: tiny jnp epilogue (no full-tensor pad/slice).
        tail = _qdq_jnp(flat[n_main:], scale_f, offset_f, qmax)
        out = jnp.concatenate([out, tail])
    return out.reshape(orig_shape)


def _reference(x, scale, offset, bitwidth):
    r_off = jnp.round(offset)
    x_q = jnp.clip(jnp.round(x / scale) - r_off, 0.0, 2 ** bitwidth - 1)
    return (x_q + r_off) * scale


if __name__ == "__main__":
    key = jax.random.PRNGKey(0)
    (kx,) = jax.random.split(key, 1)

    # Small NCHW activation tensor consistent with the module's usage.
    x = jax.random.normal(kx, (2, 4, 16, 16), dtype=jnp.float32) * 3.0

    # Deterministic "parameters" matching the module __init__ (scalar scale,
    # scalar offset drawn like torch.randint(-5, 5, []), bitwidth=8).
    scale = jnp.float32(0.1)
    offset = jnp.float32(-3.0)
    bitwidth = 8

    out = quant_dequant(x, scale, offset, bitwidth)
    out = jax.block_until_ready(out)

    ref = _reference(x, scale, offset, bitwidth)
    assert out.shape == x.shape and out.dtype == x.dtype
    assert jnp.allclose(out, ref, atol=1e-5, rtol=1e-5)

    # Misaligned-size path (ragged tail handled without full-tensor pad).
    x2 = jax.random.normal(key, (3, 5, 7), dtype=jnp.float32) * 2.0   # 105 + aligned test
    x3 = jax.random.normal(key, (11, 29), dtype=jnp.float32)          # 319 elems
    for xt in (x2, x3):
        ot = jax.block_until_ready(quant_dequant(xt, scale, offset, bitwidth))
        assert jnp.allclose(ot, _reference(xt, scale, offset, bitwidth), atol=1e-5, rtol=1e-5)

    print("KERNEL_OK")
</pallas_src>

<mosaic_0001>
module attributes {stable_mosaic.version = 11 : i64} {
  func.func @_qdq_kernel(%arg0: i32, %arg1: memref<1xf32, #tpu.memory_space<smem>>, %arg2: memref<1xf32, #tpu.memory_space<smem>>, %arg3: memref<16x128xf32, #tpu.memory_space<vmem>>, %arg4: memref<16x128xf32, #tpu.memory_space<vmem>>) attributes {dimension_semantics = [#tpu.dimension_semantics<parallel>], iteration_bounds = array<i64: 1>, scalar_prefetch = 0 : i64, scratch_operands = 0 : i64, tpu.core_type = #tpu.core_type<tc>, window_params = [{transform_indices = @transform_0, window_bounds = array<i64: 1>}, {transform_indices = @transform_1, window_bounds = array<i64: 1>}, {transform_indices = @transform_2, window_bounds = array<i64: 16, 128>}, {transform_indices = @transform_3, window_bounds = array<i64: 16, 128>}]} {
    %c0 = arith.constant 0 : index
    %0 = memref.load %arg1[%c0] : memref<1xf32, #tpu.memory_space<smem>>
    %c0_0 = arith.constant 0 : index
    %1 = memref.load %arg2[%c0_0] : memref<1xf32, #tpu.memory_space<smem>>
    %2 = math.roundeven %1 : f32
    %c0_1 = arith.constant 0 : index
    %c0_2 = arith.constant 0 : index
    %3 = vector.load %arg3[%c0_1, %c0_2] : memref<16x128xf32, #tpu.memory_space<vmem>>, vector<16x128xf32>
    %4 = vector.broadcast %0 : f32 to vector<16x128xf32>
    %5 = arith.divf %3, %4 : vector<16x128xf32>
    %6 = math.roundeven %5 : vector<16x128xf32>
    %cst = arith.constant 2.550000e+02 : f32
    %7 = arith.addf %cst, %2 : f32
    %8 = vector.broadcast %2 : f32 to vector<16x128xf32>
    %9 = arith.maximumf %8, %6 : vector<16x128xf32>
    %10 = vector.broadcast %7 : f32 to vector<16x128xf32>
    %11 = arith.minimumf %10, %9 : vector<16x128xf32>
    %12 = vector.broadcast %0 : f32 to vector<16x128xf32>
    %13 = arith.mulf %11, %12 : vector<16x128xf32>
    %c0_3 = arith.constant 0 : index
    %c0_4 = arith.constant 0 : index
    %14 = vector.load %arg4[%c0_3, %c0_4] : memref<16x128xf32, #tpu.memory_space<vmem>>, vector<16x128xf32>
    tpu.vector_store %arg4[%c0_3, %c0_4], %13 {strides = array<i32>} : memref<16x128xf32, #tpu.memory_space<vmem>>, vector<16x128xf32>,
    return
  }
  func.func @transform_0(%arg0: i32) -> i32 {
    %c0_i32 = arith.constant 0 : i32
    %c0_i32_0 = arith.constant 0 : i32
    return %c0_i32 : i32
  }
  func.func @transform_1(%arg0: i32) -> i32 {
    %c0_i32 = arith.constant 0 : i32
    %c0_i32_0 = arith.constant 0 : i32
    return %c0_i32 : i32
  }
  func.func @transform_2(%arg0: i32) -> (i32, i32) {
    %c0_i32 = arith.constant 0 : i32
    %c0_i32_0 = arith.constant 0 : i32
    return %arg0, %c0_i32 : i32, i32
  }
  func.func @transform_3(%arg0: i32) -> (i32, i32) {
    %c0_i32 = arith.constant 0 : i32
    %c0_i32_0 = arith.constant 0 : i32
    return %arg0, %c0_i32 : i32, i32
  }
}

</mosaic_0001>

<llo_original>
// kernel: tpu_custom_call.1
$region0: #{tpu_custom_call.1}
  #allocation0 [shape = 'u32[]', space=smem, size = 0x4, offset = 0x4, fixed_abs, tag = 'smem constant byte address 0x4 - core index']
  #allocation1 [shape = 'u32[144,128]{1,0:T(1,128)}', space=vmem, size = 0x12000, scoped, tag = 'internal scratch']
  #allocation2 [shape = 'f32[1]{0:T(128)S(6)}', space=smem, size = 0x200, scoped, tag = 'scoped memory for tpu_custom_call.1']
  #allocation3 [shape = 'f32[1]{0:T(128)S(6)}', space=smem, size = 0x200, scoped, tag = 'scoped memory for tpu_custom_call.1']
  %s0 = inlined_call_operand.<no memory space> [shape: f32[1], index: 0, kind: input, shape index: {}]
  %s1 = inlined_call_operand.<no memory space> [shape: f32[1], index: 1, kind: input, shape index: {}]
  %s2 = inlined_call_operand.hbm [shape: f32[16,128], index: 2, kind: input, shape index: {}]
  %s3 = inlined_call_operand.hbm [shape: f32[16,128], index: 3, kind: output, shape index: {}]
  %s4 = sld [smem:[#allocation0]]
  $region26: #{tpu_custom_call.1} parent=0
    _
  %s6 = ssub.s32 1, %s4
  %s7 = scalar_select 0, %s6, %s4
  %8 = sst [smem:[#allocation2]] %s0
  %9 = sst [smem:[#allocation3]] %s1
  $region1: #{tpu_custom_call.1} parent=0
    #allocation4 [shape = 'u8[8192]{0}', space=vmem, size = 0x2000, scoped, tag = 'input window, operand 2, single buffered']
    #allocation5 [shape = 's32[1]{0}', space=sflag, size = 0x4, scoped, tag = 'scoped memory for tpu_custom_call.1']
    #allocation6 [shape = 's32[1]{0}', space=sflag, size = 0x4, scoped, tag = 'scoped memory for tpu_custom_call.1']
    #allocation7 [shape = 'u8[8192]{0}', space=vmem, size = 0x2000, scoped, tag = 'output window, operand 0, single buffered']
    %10 = vsyncpa [#allocation5], 0
    %11 = vsyncpa [#allocation6], 0
    // Predicated region
    $region2: #{tpu_custom_call.1} parent=1 // pred_check
      _
    $region3: #{tpu_custom_call.1} parent=1 // pred_check_branch
      %13 = sbr.rel (0) target = $region5
    $region4: #{tpu_custom_call.1} parent=1 // pred_region
      _
    $region5: #{tpu_custom_call.1} parent=1 // pred_fallthru
      _
    // Predicated region
    $region6: #{tpu_custom_call.1} parent=1 // pred_check
      _
    $region7: #{tpu_custom_call.1} parent=1 // pred_check_branch
      %15 = sbr.rel (0) target = $region9
    $region8: #{tpu_custom_call.1} parent=1 // pred_region
      _
    $region9: #{tpu_custom_call.1} parent=1 // pred_fallthru
      _
    // Predicated region
    $region10: #{tpu_custom_call.1} parent=1 // pred_check
      _
    $region11: #{tpu_custom_call.1} parent=1 // pred_check_branch
      %17 = sbr.rel (0) target = $region13
    $region12: #{tpu_custom_call.1} parent=1 // pred_region
      %s19 = ssub.s32 256, 256
      %20 = vsyncadd [#allocation5], %s19
      %s21 = sshll.u32 [#allocation4], 4
      %s22 = int_to_ptr.vmem [resolvable:$true] %s21
      %27 = dma.hbm_to_vmem [thread:$0]  %s2, 256, %s22, [#allocation5], 128, 128, 8
    $region13: #{tpu_custom_call.1} parent=1 // pred_fallthru
      _
    // Predicated region
    $region14: #{tpu_custom_call.1} parent=1 // pred_check
      _
    $region15: #{tpu_custom_call.1} parent=1 // pred_check_branch
      %29 = sbr.rel (0) target = $region17
    $region16: #{tpu_custom_call.1} parent=1 // pred_region
      %30 = dma.done [#allocation5], 256
    $region17: #{tpu_custom_call.1} parent=1 // pred_fallthru
      _
    %s31 = sld [smem:[#allocation2]]
    %s32 = sld [smem:[#allocation3]]
    %s33 = scvt.f32.s32 %s32
    %s34 = scvt.s32.f32 %s33
    %s35 = sand.u32 2147483647, %s34
    %s36 = sand.u32 %s32, 2147483648
    %s37 = sor.u32 %s35, %s36
    %s38 = sand.u32 2147483647, %s32
    %p39 = scmp.lt.f32.partialorder %s38, 2.1474836e+09
    %s40 = scalar_select %p39, %s37, %s32
    %v41 = vld [vmem:[#allocation4] sm:$0xff]
    %v42 = vld [vmem:[#allocation4 + $0x8] sm:$0xff]
    %v43 = vstv %s31
    %v44 = vrcp.pop %v43
    %v45 = vmul.f32 %v41, %v44
    %v46 = vmul.f32 %v42, %v44
    %v47 = vround.ne.pseudo %v45
    %v48 = vround.ne.pseudo %v46
    %s49 = sadd.f32 %s40, 255.0
    %v50 = vstv %s40
    %v51 = vmax.f32 %v50, %v47
    %v52 = vmax.f32 %v50, %v48
    %v53 = vstv %s49
    %v54 = vmin.f32 %v53, %v51
    %v55 = vmin.f32 %v53, %v52
    %v56 = vmul.f32 %v54, %v43
    %v57 = vmul.f32 %v55, %v43
    %58 = vst [vmem:[#allocation7] sm:$0xff] %v56
    %59 = vst [vmem:[#allocation7 + $0x8] sm:$0xff] %v57
    // Predicated region
    $region18: #{tpu_custom_call.1} parent=1 // pred_check
      _
    $region19: #{tpu_custom_call.1} parent=1 // pred_check_branch
      %61 = sbr.rel (0) target = $region21
    $region20: #{tpu_custom_call.1} parent=1 // pred_region
      %s63 = ssub.s32 256, 256
      %64 = vsyncadd [#allocation6], %s63
      %s65 = sshll.u32 [#allocation7], 4
      %s66 = int_to_ptr.vmem [resolvable:$true] %s65
      %71 = dma.vmem_to_hbm [thread:$0]  %s66, 256, %s3, [#allocation6], 128, 128, 8
    $region21: #{tpu_custom_call.1} parent=1 // pred_fallthru
      _
    // Predicated region
    $region22: #{tpu_custom_call.1} parent=1 // pred_check
      _
    $region23: #{tpu_custom_call.1} parent=1 // pred_check_branch
      %73 = sbr.rel (0) target = $region25
    $region24: #{tpu_custom_call.1} parent=1 // pred_region
      %74 = dma.done [#allocation6], 256
    $region25: #{tpu_custom_call.1} parent=1 // pred_fallthru
      _
    %75 = vsyncpa [#allocation5], 1
    %76 = vsyncpa [#allocation6], 1

</llo_original>
